<compile_context>
chip_gen: v7x
topology: tpu7x:2x2x1
jax: 0.10.0
libtpu: 0.0.40
codegen_flags: <defaults>
</compile_context>

<pallas_src>
import numpy as np
import jax
import jax.numpy as jnp
from jax.experimental import pallas as pl
from jax.experimental.pallas import tpu as pltpu

VOCAB_SIZE = 64
EMBED_DIM = 32
ENCODE_DIM = 32
BATCH_SIZE = 4


# ---------------------------------------------------------------------------
# Fused kernel: fold table + all recursion levels + max pool, one pallas_call.
# ---------------------------------------------------------------------------
def _fused_encoder_kernel(dep_ref, tok_ref, msk_ref,        # SMEM (scalar prefetch)
                          emb_ref, w_ref, b_ref,            # VMEM inputs (resident)
                          out_ref,                          # VMEM output
                          table_ref, val_ref, acc_ref, max_ref):  # VMEM scratch
    s = pl.program_id(0)
    B = val_ref.shape[0]

    @pl.when(s == 0)
    def _init():
        # E' = embedding @ W + b  (folded linear; one tiny MXU pass, no extra call)
        table_ref[...] = (
            jnp.dot(emb_ref[...], w_ref[...], preferred_element_type=jnp.float32)
            + b_ref[...]
        )
        acc_ref[...] = jnp.zeros_like(acc_ref)
        max_ref[...] = jnp.full_like(max_ref, -jnp.inf)

    k = dep_ref[s]                       # recursion depth of this call

    # Start from the sum of this call's children (post-order guarantees they all
    # accumulated into depth bucket k+1 and nothing else did).
    val_ref[...] = acc_ref[k + 1]

    # Gather E'[token] per batch row via SMEM-indexed dynamic row loads (no scatter).
    for r in range(B):                   # B is tiny and static -> fully unrolled
        t = tok_ref[s, r]
        m = msk_ref[s, r].astype(jnp.float32)
        val_ref[pl.ds(r, 1), :] = (
            val_ref[pl.ds(r, 1), :] + table_ref[pl.ds(t, 1), :] * m
        )

    v = val_ref[...]
    acc_ref[k + 1] = jnp.zeros_like(v)   # consumed: reset for the next sibling group
    acc_ref[k] = acc_ref[k] + v          # contribute to the parent's children-sum
    max_ref[...] = jnp.maximum(max_ref[...], v)

    @pl.when(s == pl.num_programs(0) - 1)
    def _finalize():
        out_ref[...] = max_ref[...]      # single HBM store per forward


def fused_tree_encode(emb, w, b, depths, tokens, masks, batch_size, max_depth):
    """emb:(V,Din) w:(Din,Dout) b:(1,Dout); depths:(L,) tokens/masks:(L,B) int32."""
    L = int(depths.shape[0])
    V, Din = emb.shape
    Dout = w.shape[1]
    B = batch_size

    grid_spec = pltpu.PrefetchScalarGridSpec(
        num_scalar_prefetch=3,
        grid=(L,),
        in_specs=[
            pl.BlockSpec((V, Din), lambda s, d, t, m: (0, 0)),
            pl.BlockSpec((Din, Dout), lambda s, d, t, m: (0, 0)),
            pl.BlockSpec((1, Dout), lambda s, d, t, m: (0, 0)),
        ],
        out_specs=pl.BlockSpec((B, Dout), lambda s, d, t, m: (0, 0)),
        scratch_shapes=[
            pltpu.VMEM((V, Dout), jnp.float32),                   # folded table E'
            pltpu.VMEM((B, Dout), jnp.float32),                   # current call value
            pltpu.VMEM((max_depth + 2, B, Dout), jnp.float32),    # per-depth child sums
            pltpu.VMEM((B, Dout), jnp.float32),                   # running max
        ],
    )
    return pl.pallas_call(
        _fused_encoder_kernel,
        out_shape=jax.ShapeDtypeStruct((B, Dout), jnp.float32),
        grid_spec=grid_spec,
        compiler_params=pltpu.CompilerParams(
            dimension_semantics=("arbitrary",),   # levels form a dependence chain
        ),
    )(depths, tokens, masks, emb, w, b)


# ---------------------------------------------------------------------------
# BatchTreeEncoder: host-side schedule builder + single fused kernel call.
# ---------------------------------------------------------------------------
class BatchTreeEncoder:
    def __init__(self, vocab_size, embedding_dim, encode_dim, batch_size, key):
        k1, k2, k3 = jax.random.split(key, 3)
        # Same parameter shapes as nn.Embedding / nn.Linear (W stored transposed).
        self.embedding = 0.1 * jax.random.normal(
            k1, (vocab_size, embedding_dim), jnp.float32)
        self.w = 0.1 * jax.random.normal(
            k2, (embedding_dim, encode_dim), jnp.float32)
        self.b = 0.1 * jax.random.normal(k3, (1, encode_dim), jnp.float32)
        self.embedding_dim = embedding_dim
        self.encode_dim = encode_dim
        self.batch_size = batch_size

    # TODO(synk): the tree walk itself is inherently data-dependent Python control
    # flow; it only builds the int32 schedule tables that drive the fused kernel.
    def _build_schedule(self, x, bs):
        depths, tokens, masks = [], [], []

        def rec(node, batch_index, depth):
            size = len(node)
            if not size:
                return
            current_node, children_index, children = [], [], []
            for i in range(size):
                current_node.append(node[i][0])
                temp = node[i][1:]
                for j in range(len(temp)):
                    if temp[j][0] != -1:
                        if len(children_index) <= j:
                            children_index.append([i])
                            children.append([temp[j]])
                        else:
                            children_index[j].append(i)
                            children[j].append(temp[j])
            for c in range(len(children)):          # children first (post-order)
                rec(children[c],
                    [batch_index[i] for i in children_index[c]], depth + 1)
            tok_row = [0] * bs
            msk_row = [0] * bs
            for i in range(size):
                tok_row[batch_index[i]] = current_node[i]
                msk_row[batch_index[i]] = 1
            depths.append(depth)
            tokens.append(tok_row)
            masks.append(msk_row)

        rec(x, list(range(bs)), 0)
        return (np.asarray(depths, np.int32),
                np.asarray(tokens, np.int32),
                np.asarray(masks, np.int32))

    def forward(self, x, bs):
        self.batch_size = bs
        depths, tokens, masks = self._build_schedule(x, bs)
        max_depth = int(depths.max())
        return fused_tree_encode(
            self.embedding, self.w, self.b,
            jnp.asarray(depths), jnp.asarray(tokens), jnp.asarray(masks),
            bs, max_depth)


# ---------------------------------------------------------------------------
# Pure-numpy reference mirroring the original PyTorch recursion exactly.
# ---------------------------------------------------------------------------
def reference_forward(emb, w, b, x, bs):
    emb = np.asarray(emb); w = np.asarray(w); b = np.asarray(b)
    encode_dim = w.shape[1]
    node_list = []

    def traverse(node, batch_index):
        size = len(node)
        if not size:
            return None
        current_node, children_index, children = [], [], []
        for i in range(size):
            current_node.append(node[i][0])
            temp = node[i][1:]
            for j in range(len(temp)):
                if temp[j][0] != -1:
                    if len(children_index) <= j:
                        children_index.append([i]); children.append([temp[j]])
                    else:
                        children_index[j].append(i); children[j].append(temp[j])
        batch_current = emb[np.asarray(current_node)] @ w + b
        for c in range(len(children)):
            bci = [batch_index[i] for i in children_index[c]]
            tree = traverse(children[c], bci)
            if tree is not None:
                add = np.zeros((size, encode_dim), np.float32)
                add[np.asarray(children_index[c])] = tree
                batch_current = batch_current + add
        entry = np.zeros((bs, encode_dim), np.float32)
        entry[np.asarray(batch_index)] = batch_current
        node_list.append(entry)
        return batch_current

    traverse(x, list(range(bs)))
    return np.max(np.stack(node_list), axis=0)


# ---------------------------------------------------------------------------
# Deterministic example trees (ragged nested lists, [-1] == stop marker)
# ---------------------------------------------------------------------------
def make_trees():
    t0 = [3, [5, [7], [-1]], [9, [2]]]
    t1 = [11, [4], [6, [8], [10]]]
    t2 = [13, [-1], [1, [12]]]
    t3 = [2, [14, [15, [3]]]]
    return [t0, t1, t2, t3]


if __name__ == "__main__":
    key = jax.random.PRNGKey(0)
    trees = make_trees()

    enc = BatchTreeEncoder(VOCAB_SIZE, EMBED_DIM, ENCODE_DIM, BATCH_SIZE, key)
    out = jax.block_until_ready(enc.forward(trees, BATCH_SIZE))
    assert out.shape == (BATCH_SIZE, ENCODE_DIM)
    assert out.dtype == jnp.float32

    ref = reference_forward(enc.embedding, enc.w, enc.b, trees, BATCH_SIZE)
    assert np.allclose(np.asarray(out), ref, atol=1e-4, rtol=1e-4)

    print("KERNEL_OK")
</pallas_src>

<mosaic_0001>
module attributes {stable_mosaic.version = 11 : i64} {
  func.func @_fused_encoder_kernel(%arg0: i32, %arg1: memref<7xi32, #tpu.memory_space<smem>>, %arg2: memref<7x4xi32, #tpu.memory_space<smem>>, %arg3: memref<7x4xi32, #tpu.memory_space<smem>>, %arg4: memref<64x32xf32, #tpu.memory_space<vmem>>, %arg5: memref<32x32xf32, #tpu.memory_space<vmem>>, %arg6: memref<1x32xf32, #tpu.memory_space<vmem>>, %arg7: memref<4x32xf32, #tpu.memory_space<vmem>>, %arg8: memref<64x32xf32, #tpu.memory_space<vmem>>, %arg9: memref<4x32xf32, #tpu.memory_space<vmem>>, %arg10: memref<5x4x32xf32, #tpu.memory_space<vmem>>, %arg11: memref<4x32xf32, #tpu.memory_space<vmem>>) attributes {dimension_semantics = [#tpu.dimension_semantics<arbitrary>], iteration_bounds = array<i64: 7>, scalar_prefetch = 3 : i64, scratch_operands = 4 : i64, tpu.core_type = #tpu.core_type<tc>, window_params = [{pipeline_mode = #tpu.pipeline_mode<synchronous>, transform_indices = @transform_0, window_bounds = array<i64: 64, 32>}, {pipeline_mode = #tpu.pipeline_mode<synchronous>, transform_indices = @transform_1, window_bounds = array<i64: 32, 32>}, {pipeline_mode = #tpu.pipeline_mode<synchronous>, transform_indices = @transform_2, window_bounds = array<i64: 1, 32>}, {pipeline_mode = #tpu.pipeline_mode<synchronous>, transform_indices = @transform_3, window_bounds = array<i64: 4, 32>}]} {
    %c0_i32 = arith.constant 0 : i32
    %0 = arith.cmpi eq, %arg0, %c0_i32 : i32
    %1 = arith.extui %0 : i1 to i32
    %c0_i32_0 = arith.constant 0 : i32
    %2 = arith.cmpi ne, %1, %c0_i32_0 : i32
    scf.if %2 {
      %c0_43 = arith.constant 0 : index
      %c0_44 = arith.constant 0 : index
      %79 = vector.load %arg4[%c0_43, %c0_44] : memref<64x32xf32, #tpu.memory_space<vmem>>, vector<64x32xf32>
      %c0_45 = arith.constant 0 : index
      %c0_46 = arith.constant 0 : index
      %80 = vector.load %arg5[%c0_45, %c0_46] : memref<32x32xf32, #tpu.memory_space<vmem>>, vector<32x32xf32>
      %cst_47 = arith.constant dense<0.000000e+00> : vector<64x32xf32>
      %81 = tpu.matmul %79, %80, %cst_47 {dimension_numbers = #tpu.dot_dimension_numbers<[1], [0], [0], [1], [0, 0, 1, 1], [], []>} : vector<64x32xf32>, vector<32x32xf32>, vector<64x32xf32> -> vector<64x32xf32>
      %c0_48 = arith.constant 0 : index
      %c0_49 = arith.constant 0 : index
      %82 = vector.load %arg6[%c0_48, %c0_49] : memref<1x32xf32, #tpu.memory_space<vmem>>, vector<1x32xf32>
      %83 = vector.broadcast %82 : vector<1x32xf32> to vector<64x32xf32>
      %84 = arith.addf %81, %83 : vector<64x32xf32>
      %c0_50 = arith.constant 0 : index
      %c0_51 = arith.constant 0 : index
      %85 = vector.load %arg8[%c0_50, %c0_51] : memref<64x32xf32, #tpu.memory_space<vmem>>, vector<64x32xf32>
      tpu.vector_store %arg8[%c0_50, %c0_51], %84 {strides = array<i32>} : memref<64x32xf32, #tpu.memory_space<vmem>>, vector<64x32xf32>,
      %cst_52 = arith.constant 0.000000e+00 : f32
      %86 = vector.broadcast %cst_52 : f32 to vector<5x4x32xf32>
      %c0_53 = arith.constant 0 : index
      %c0_54 = arith.constant 0 : index
      %c0_55 = arith.constant 0 : index
      %87 = vector.load %arg10[%c0_53, %c0_54, %c0_55] : memref<5x4x32xf32, #tpu.memory_space<vmem>>, vector<5x4x32xf32>
      tpu.vector_store %arg10[%c0_53, %c0_54, %c0_55], %86 {strides = array<i32>} : memref<5x4x32xf32, #tpu.memory_space<vmem>>, vector<5x4x32xf32>,
      %cst_56 = arith.constant 0xFF800000 : f32
      %88 = vector.broadcast %cst_56 : f32 to vector<4x32xf32>
      %c0_57 = arith.constant 0 : index
      %c0_58 = arith.constant 0 : index
      %89 = vector.load %arg11[%c0_57, %c0_58] : memref<4x32xf32, #tpu.memory_space<vmem>>, vector<4x32xf32>
      tpu.vector_store %arg11[%c0_57, %c0_58], %88 {strides = array<i32>} : memref<4x32xf32, #tpu.memory_space<vmem>>, vector<4x32xf32>,
    } else {
    }
    %3 = arith.index_cast %arg0 : i32 to index
    %4 = memref.load %arg1[%3] : memref<7xi32, #tpu.memory_space<smem>>
    %c1_i32 = arith.constant 1 : i32
    %5 = arith.addi %4, %c1_i32 : i32
    %6 = arith.index_cast %5 : i32 to index
    %c0 = arith.constant 0 : index
    %c0_1 = arith.constant 0 : index
    %7 = vector.load %arg10[%6, %c0, %c0_1] : memref<5x4x32xf32, #tpu.memory_space<vmem>>, vector<1x4x32xf32>
    %8 = vector.shape_cast %7 : vector<1x4x32xf32> to vector<4x32xf32>
    %c0_2 = arith.constant 0 : index
    %c0_3 = arith.constant 0 : index
    %9 = vector.load %arg9[%c0_2, %c0_3] : memref<4x32xf32, #tpu.memory_space<vmem>>, vector<4x32xf32>
    tpu.vector_store %arg9[%c0_2, %c0_3], %8 {strides = array<i32>} : memref<4x32xf32, #tpu.memory_space<vmem>>, vector<4x32xf32>,
    %10 = arith.index_cast %arg0 : i32 to index
    %c0_4 = arith.constant 0 : index
    %11 = memref.load %arg2[%10, %c0_4] : memref<7x4xi32, #tpu.memory_space<smem>>
    %12 = arith.index_cast %arg0 : i32 to index
    %c0_5 = arith.constant 0 : index
    %13 = memref.load %arg3[%12, %c0_5] : memref<7x4xi32, #tpu.memory_space<smem>>
    %14 = arith.sitofp %13 : i32 to f32
    %c0_6 = arith.constant 0 : index
    %c0_7 = arith.constant 0 : index
    %15 = vector.load %arg9[%c0_6, %c0_7] : memref<4x32xf32, #tpu.memory_space<vmem>>, vector<1x32xf32>
    %16 = arith.index_cast %11 : i32 to index
    %c0_8 = arith.constant 0 : index
    %17 = vector.load %arg8[%16, %c0_8] : memref<64x32xf32, #tpu.memory_space<vmem>>, vector<1x32xf32>
    %18 = vector.broadcast %14 : f32 to vector<1x32xf32>
    %19 = arith.mulf %17, %18 : vector<1x32xf32>
    %20 = arith.addf %15, %19 : vector<1x32xf32>
    %c0_9 = arith.constant 0 : index
    %c0_10 = arith.constant 0 : index
    %21 = vector.load %arg9[%c0_9, %c0_10] : memref<4x32xf32, #tpu.memory_space<vmem>>, vector<1x32xf32>
    tpu.vector_store %arg9[%c0_9, %c0_10], %20 {strides = array<i32>} : memref<4x32xf32, #tpu.memory_space<vmem>>, vector<1x32xf32>,
    %22 = arith.index_cast %arg0 : i32 to index
    %c1 = arith.constant 1 : index
    %23 = memref.load %arg2[%22, %c1] : memref<7x4xi32, #tpu.memory_space<smem>>
    %24 = arith.index_cast %arg0 : i32 to index
    %c1_11 = arith.constant 1 : index
    %25 = memref.load %arg3[%24, %c1_11] : memref<7x4xi32, #tpu.memory_space<smem>>
    %26 = arith.sitofp %25 : i32 to f32
    %c1_12 = arith.constant 1 : index
    %c0_13 = arith.constant 0 : index
    %27 = vector.load %arg9[%c1_12, %c0_13] : memref<4x32xf32, #tpu.memory_space<vmem>>, vector<1x32xf32>
    %28 = arith.index_cast %23 : i32 to index
    %c0_14 = arith.constant 0 : index
    %29 = vector.load %arg8[%28, %c0_14] : memref<64x32xf32, #tpu.memory_space<vmem>>, vector<1x32xf32>
    %30 = vector.broadcast %26 : f32 to vector<1x32xf32>
    %31 = arith.mulf %29, %30 : vector<1x32xf32>
    %32 = arith.addf %27, %31 : vector<1x32xf32>
    %c1_15 = arith.constant 1 : index
    %c0_16 = arith.constant 0 : index
    %33 = vector.load %arg9[%c1_15, %c0_16] : memref<4x32xf32, #tpu.memory_space<vmem>>, vector<1x32xf32>
    tpu.vector_store %arg9[%c1_15, %c0_16], %32 {strides = array<i32>} : memref<4x32xf32, #tpu.memory_space<vmem>>, vector<1x32xf32>,
    %34 = arith.index_cast %arg0 : i32 to index
    %c2 = arith.constant 2 : index
    %35 = memref.load %arg2[%34, %c2] : memref<7x4xi32, #tpu.memory_space<smem>>
    %36 = arith.index_cast %arg0 : i32 to index
    %c2_17 = arith.constant 2 : index
    %37 = memref.load %arg3[%36, %c2_17] : memref<7x4xi32, #tpu.memory_space<smem>>
    %38 = arith.sitofp %37 : i32 to f32
    %c2_18 = arith.constant 2 : index
    %c0_19 = arith.constant 0 : index
    %39 = vector.load %arg9[%c2_18, %c0_19] : memref<4x32xf32, #tpu.memory_space<vmem>>, vector<1x32xf32>
    %40 = arith.index_cast %35 : i32 to index
    %c0_20 = arith.constant 0 : index
    %41 = vector.load %arg8[%40, %c0_20] : memref<64x32xf32, #tpu.memory_space<vmem>>, vector<1x32xf32>
    %42 = vector.broadcast %38 : f32 to vector<1x32xf32>
    %43 = arith.mulf %41, %42 : vector<1x32xf32>
    %44 = arith.addf %39, %43 : vector<1x32xf32>
    %c2_21 = arith.constant 2 : index
    %c0_22 = arith.constant 0 : index
    %45 = vector.load %arg9[%c2_21, %c0_22] : memref<4x32xf32, #tpu.memory_space<vmem>>, vector<1x32xf32>
    tpu.vector_store %arg9[%c2_21, %c0_22], %44 {strides = array<i32>} : memref<4x32xf32, #tpu.memory_space<vmem>>, vector<1x32xf32>,
    %46 = arith.index_cast %arg0 : i32 to index
    %c3 = arith.constant 3 : index
    %47 = memref.load %arg2[%46, %c3] : memref<7x4xi32, #tpu.memory_space<smem>>
    %48 = arith.index_cast %arg0 : i32 to index
    %c3_23 = arith.constant 3 : index
    %49 = memref.load %arg3[%48, %c3_23] : memref<7x4xi32, #tpu.memory_space<smem>>
    %50 = arith.sitofp %49 : i32 to f32
    %c3_24 = arith.constant 3 : index
    %c0_25 = arith.constant 0 : index
    %51 = vector.load %arg9[%c3_24, %c0_25] : memref<4x32xf32, #tpu.memory_space<vmem>>, vector<1x32xf32>
    %52 = arith.index_cast %47 : i32 to index
    %c0_26 = arith.constant 0 : index
    %53 = vector.load %arg8[%52, %c0_26] : memref<64x32xf32, #tpu.memory_space<vmem>>, vector<1x32xf32>
    %54 = vector.broadcast %50 : f32 to vector<1x32xf32>
    %55 = arith.mulf %53, %54 : vector<1x32xf32>
    %56 = arith.addf %51, %55 : vector<1x32xf32>
    %c3_27 = arith.constant 3 : index
    %c0_28 = arith.constant 0 : index
    %57 = vector.load %arg9[%c3_27, %c0_28] : memref<4x32xf32, #tpu.memory_space<vmem>>, vector<1x32xf32>
    tpu.vector_store %arg9[%c3_27, %c0_28], %56 {strides = array<i32>} : memref<4x32xf32, #tpu.memory_space<vmem>>, vector<1x32xf32>,
    %c0_29 = arith.constant 0 : index
    %c0_30 = arith.constant 0 : index
    %58 = vector.load %arg9[%c0_29, %c0_30] : memref<4x32xf32, #tpu.memory_space<vmem>>, vector<4x32xf32>
    %cst = arith.constant 0.000000e+00 : f32
    %59 = vector.broadcast %cst : f32 to vector<4x32xf32>
    %c1_i32_31 = arith.constant 1 : i32
    %60 = arith.addi %4, %c1_i32_31 : i32
    %61 = arith.index_cast %60 : i32 to index
    %c0_32 = arith.constant 0 : index
    %c0_33 = arith.constant 0 : index
    %62 = vector.load %arg10[%61, %c0_32, %c0_33] : memref<5x4x32xf32, #tpu.memory_space<vmem>>, vector<1x4x32xf32>
    %63 = vector.shape_cast %62 : vector<1x4x32xf32> to vector<4x32xf32>
    %64 = vector.shape_cast %59 : vector<4x32xf32> to vector<1x4x32xf32>
    tpu.vector_store %arg10[%61, %c0_32, %c0_33], %64 {strides = array<i32>} : memref<5x4x32xf32, #tpu.memory_space<vmem>>, vector<1x4x32xf32>,
    %65 = arith.index_cast %4 : i32 to index
    %c0_34 = arith.constant 0 : index
    %c0_35 = arith.constant 0 : index
    %66 = vector.load %arg10[%65, %c0_34, %c0_35] : memref<5x4x32xf32, #tpu.memory_space<vmem>>, vector<1x4x32xf32>
    %67 = vector.shape_cast %66 : vector<1x4x32xf32> to vector<4x32xf32>
    %68 = arith.addf %67, %58 : vector<4x32xf32>
    %69 = arith.index_cast %4 : i32 to index
    %c0_36 = arith.constant 0 : index
    %c0_37 = arith.constant 0 : index
    %70 = vector.load %arg10[%69, %c0_36, %c0_37] : memref<5x4x32xf32, #tpu.memory_space<vmem>>, vector<1x4x32xf32>
    %71 = vector.shape_cast %70 : vector<1x4x32xf32> to vector<4x32xf32>
    %72 = vector.shape_cast %68 : vector<4x32xf32> to vector<1x4x32xf32>
    tpu.vector_store %arg10[%69, %c0_36, %c0_37], %72 {strides = array<i32>} : memref<5x4x32xf32, #tpu.memory_space<vmem>>, vector<1x4x32xf32>,
    %c0_38 = arith.constant 0 : index
    %c0_39 = arith.constant 0 : index
    %73 = vector.load %arg11[%c0_38, %c0_39] : memref<4x32xf32, #tpu.memory_space<vmem>>, vector<4x32xf32>
    %74 = arith.maximumf %73, %58 : vector<4x32xf32>
    %c0_40 = arith.constant 0 : index
    %c0_41 = arith.constant 0 : index
    %75 = vector.load %arg11[%c0_40, %c0_41] : memref<4x32xf32, #tpu.memory_space<vmem>>, vector<4x32xf32>
    tpu.vector_store %arg11[%c0_40, %c0_41], %74 {strides = array<i32>} : memref<4x32xf32, #tpu.memory_space<vmem>>, vector<4x32xf32>,
    %c6_i32 = arith.constant 6 : i32
    %76 = arith.cmpi eq, %arg0, %c6_i32 : i32
    %77 = arith.extui %76 : i1 to i32
    %c0_i32_42 = arith.constant 0 : i32
    %78 = arith.cmpi ne, %77, %c0_i32_42 : i32
    scf.if %78 {
      %c0_43 = arith.constant 0 : index
      %c0_44 = arith.constant 0 : index
      %79 = vector.load %arg11[%c0_43, %c0_44] : memref<4x32xf32, #tpu.memory_space<vmem>>, vector<4x32xf32>
      %c0_45 = arith.constant 0 : index
      %c0_46 = arith.constant 0 : index
      %80 = vector.load %arg7[%c0_45, %c0_46] : memref<4x32xf32, #tpu.memory_space<vmem>>, vector<4x32xf32>
      tpu.vector_store %arg7[%c0_45, %c0_46], %79 {strides = array<i32>} : memref<4x32xf32, #tpu.memory_space<vmem>>, vector<4x32xf32>,
    } else {
    }
    return
  }
  func.func @transform_0(%arg0: i32, %arg1: memref<7xi32, #tpu.memory_space<smem>>, %arg2: memref<7x4xi32, #tpu.memory_space<smem>>, %arg3: memref<7x4xi32, #tpu.memory_space<smem>>) -> (i32, i32) {
    %c0_i32 = arith.constant 0 : i32
    %c0_i32_0 = arith.constant 0 : i32
    %c0_i32_1 = arith.constant 0 : i32
    return %c0_i32, %c0_i32_0 : i32, i32
  }
  func.func @transform_1(%arg0: i32, %arg1: memref<7xi32, #tpu.memory_space<smem>>, %arg2: memref<7x4xi32, #tpu.memory_space<smem>>, %arg3: memref<7x4xi32, #tpu.memory_space<smem>>) -> (i32, i32) {
    %c0_i32 = arith.constant 0 : i32
    %c0_i32_0 = arith.constant 0 : i32
    %c0_i32_1 = arith.constant 0 : i32
    return %c0_i32, %c0_i32_0 : i32, i32
  }
  func.func @transform_2(%arg0: i32, %arg1: memref<7xi32, #tpu.memory_space<smem>>, %arg2: memref<7x4xi32, #tpu.memory_space<smem>>, %arg3: memref<7x4xi32, #tpu.memory_space<smem>>) -> (i32, i32) {
    %c0_i32 = arith.constant 0 : i32
    %c0_i32_0 = arith.constant 0 : i32
    %c0_i32_1 = arith.constant 0 : i32
    return %c0_i32, %c0_i32_0 : i32, i32
  }
  func.func @transform_3(%arg0: i32, %arg1: memref<7xi32, #tpu.memory_space<smem>>, %arg2: memref<7x4xi32, #tpu.memory_space<smem>>, %arg3: memref<7x4xi32, #tpu.memory_space<smem>>) -> (i32, i32) {
    %c0_i32 = arith.constant 0 : i32
    %c0_i32_0 = arith.constant 0 : i32
    %c0_i32_1 = arith.constant 0 : i32
    return %c0_i32, %c0_i32_0 : i32, i32
  }
}

</mosaic_0001>

<llo_original>
// kernel: tpu_custom_call.1
$region0: #{tpu_custom_call.1}
  #allocation0 [shape = 'u32[]', space=smem, size = 0x4, offset = 0x4, fixed_abs, tag = 'smem constant byte address 0x4 - core index']
  #allocation1 [shape = 'u32[144,128]{1,0:T(1,128)}', space=vmem, size = 0x12000, scoped, tag = 'internal scratch']
  #allocation2 [shape = 'f32[64,32]{1,0:T(8,128)}', space=vmem, size = 0x8000, scoped, tag = 'scratch operand']
  #allocation3 [shape = 'f32[4,32]{1,0:T(4,128)}', space=vmem, size = 0x800, scoped, tag = 'scratch operand']
  #allocation4 [shape = 'f32[5,4,32]{2,1,0:T(4,128)}', space=vmem, size = 0x2800, scoped, tag = 'scratch operand']
  #allocation5 [shape = 'f32[4,32]{1,0:T(4,128)}', space=vmem, size = 0x800, scoped, tag = 'scratch operand']
  #allocation6 [shape = 's32[1]{0}', space=sflag, size = 0x4, scoped, tag = 'scoped memory for tpu_custom_call.1']
  #allocation7 [shape = 'u8[512]{0}', space=smem, size = 0x200, scoped, tag = 'prefetched SMEM operand 0']
  #allocation8 [shape = 'u8[4096]{0}', space=smem, size = 0x1000, scoped, tag = 'prefetched SMEM operand 1']
  #allocation9 [shape = 'u8[4096]{0}', space=smem, size = 0x1000, scoped, tag = 'prefetched SMEM operand 2']
  %s0 = inlined_call_operand.vmem [shape: s32[7], index: 0, kind: input, shape index: {}]
  %s1 = inlined_call_operand.vmem [shape: s32[7,4], index: 1, kind: input, shape index: {}]
  %s2 = inlined_call_operand.vmem [shape: s32[7,4], index: 2, kind: input, shape index: {}]
  %s3 = inlined_call_operand.vmem [shape: f32[64,32], index: 3, kind: input, shape index: {}]
  %s4 = inlined_call_operand.vmem [shape: f32[32,32], index: 4, kind: input, shape index: {}]
  %s5 = inlined_call_operand.vmem [shape: f32[1,32], index: 5, kind: input, shape index: {}]
  %s6 = inlined_call_operand.hbm [shape: f32[4,32], index: 6, kind: output, shape index: {}]
  %s7 = sld [smem:[#allocation0]]
  $region53: #{tpu_custom_call.1} parent=0
    _
  %s9 = ssub.s32 1, %s7
  %s10 = scalar_select 0, %s9, %s7
  %s11 = sshll.u32 %s0, 4
  %s12 = int_to_ptr.vmem [resolvable:$true] %s11
  %14 = dma.vmem_to_smem %s12, 16, [#allocation7], [#allocation6]
  %s15 = sshll.u32 %s1, 4
  %s16 = int_to_ptr.vmem [resolvable:$true] %s15
  %18 = dma.vmem_to_smem %s16, 128, [#allocation8], [#allocation6]
  %s19 = sshll.u32 %s2, 4
  %s20 = int_to_ptr.vmem [resolvable:$true] %s19
  %22 = dma.vmem_to_smem %s20, 128, [#allocation9], [#allocation6]
  %23 = dma.done [#allocation6], 272
  %24 = sfence
  $region1: #{tpu_custom_call.1} parent=0
    #allocation10 [shape = 'u8[2048]{0}', space=vmem, size = 0x800, scoped, tag = 'output window, operand 0, single buffered']
    #allocation11 [shape = 's32[2]{0}', space=sflag, size = 0x8, scoped, tag = 'scoped memory for tpu_custom_call.1']
    %25 = vsyncpa [#allocation11], 0
    loop: start=0, step=1, limit=9
    $region2: #{tpu_custom_call.1} parent=1 // loop_pre_header
      _
    $region3: #{tpu_custom_call.1} parent=1 // loop_header
      %s27 = sphi 0, %s31
      %p28 = scmp.ge.s32.totalorder %s27, 9
      %s35 = sphi 0, %s35
      %s37 = sphi 0, %s35
      %s38 = sphi 0, %s37
      %s52 = sphi 0, %s38
      %s56 = sphi 0, %s56
      %s58 = sphi 0, %s56
      %s59 = sphi 0, %s58
      %s73 = sphi 0, %s59
      %s77 = sphi 0, %s77
      %s79 = sphi 0, %s77
      %s80 = sphi 0, %s79
      %s94 = sphi 0, %s80
      %s98 = sphi 0, %s98
      %s100 = sphi 0, %s98
      %s101 = sphi 0, %s100
      %s115 = sphi 0, %s101
    $region4: #{tpu_custom_call.1} parent=1 // loop_header_branch
      %30 = sbr.rel (%p28) target = $region8
    $region5: #{tpu_custom_call.1} parent=1 // loop_body
      %s32 = ssub.s32 %s27, 1
      %s33 = ssub.s32 %s27, 2
      %s34 = sadd.s32 %s27, 1
      %s36 = sadd.s32 %s35, 1
      %p39 = scmp.eq.s32.totalorder %s27, 6
      %p40 = scmp.ne.s32.totalorder %s35, %s37
      %p41 = scmp.eq.s32.totalorder %s27, 0
      %p42 = por %p40, %p41
      %p43 = scmp.ne.s32.totalorder %s35, %s37
      %p44 = scmp.eq.s32.totalorder %s32, 6
      %p45 = por %p43, %p44
      %p46 = scmp.ne.s32.totalorder %s37, %s38
      %p47 = scmp.eq.s32.totalorder %s32, 0
      %p48 = por %p46, %p47
      %p49 = scmp.ne.s32.totalorder %s37, %s38
      %p50 = scmp.eq.s32.totalorder %s33, 6
      %p51 = por %p49, %p50
      %p53 = scmp.ne.s32.totalorder %s38, %s52
      %p54 = scmp.eq.s32.totalorder %s33, 0
      %p55 = por %p53, %p54
      %s57 = sadd.s32 %s56, 1
      %p60 = scmp.eq.s32.totalorder %s27, 6
      %p61 = scmp.ne.s32.totalorder %s56, %s58
      %p62 = scmp.eq.s32.totalorder %s27, 0
      %p63 = por %p61, %p62
      %p64 = scmp.ne.s32.totalorder %s56, %s58
      %p65 = scmp.eq.s32.totalorder %s32, 6
      %p66 = por %p64, %p65
      %p67 = scmp.ne.s32.totalorder %s58, %s59
      %p68 = scmp.eq.s32.totalorder %s32, 0
      %p69 = por %p67, %p68
      %p70 = scmp.ne.s32.totalorder %s58, %s59
      %p71 = scmp.eq.s32.totalorder %s33, 6
      %p72 = por %p70, %p71
      %p74 = scmp.ne.s32.totalorder %s59, %s73
      %p75 = scmp.eq.s32.totalorder %s33, 0
      %p76 = por %p74, %p75
      %s78 = sadd.s32 %s77, 1
      %p81 = scmp.eq.s32.totalorder %s27, 6
      %p82 = scmp.ne.s32.totalorder %s77, %s79
      %p83 = scmp.eq.s32.totalorder %s27, 0
      %p84 = por %p82, %p83
      %p85 = scmp.ne.s32.totalorder %s77, %s79
      %p86 = scmp.eq.s32.totalorder %s32, 6
      %p87 = por %p85, %p86
      %p88 = scmp.ne.s32.totalorder %s79, %s80
      %p89 = scmp.eq.s32.totalorder %s32, 0
      %p90 = por %p88, %p89
      %p91 = scmp.ne.s32.totalorder %s79, %s80
      %p92 = scmp.eq.s32.totalorder %s33, 6
      %p93 = por %p91, %p92
      %p95 = scmp.ne.s32.totalorder %s80, %s94
      %p96 = scmp.eq.s32.totalorder %s33, 0
      %p97 = por %p95, %p96
      %s99 = sadd.s32 %s98, 1
      %p102 = scmp.eq.s32.totalorder %s27, 6
      %p103 = scmp.ne.s32.totalorder %s98, %s100
      %p104 = scmp.eq.s32.totalorder %s27, 0
      %p105 = por %p103, %p104
      %p106 = scmp.ne.s32.totalorder %s98, %s100
      %p107 = scmp.eq.s32.totalorder %s32, 6
      %p108 = por %p106, %p107
      %p109 = scmp.ne.s32.totalorder %s100, %s101
      %p110 = scmp.eq.s32.totalorder %s32, 0
      %p111 = por %p109, %p110
      %p112 = scmp.ne.s32.totalorder %s100, %s101
      %p113 = scmp.eq.s32.totalorder %s33, 6
      %p114 = por %p112, %p113
      %p116 = scmp.ne.s32.totalorder %s101, %s115
      %p117 = scmp.eq.s32.totalorder %s33, 0
      %p118 = por %p116, %p117
      %p119 = scmp.le.s32.totalorder 1, %s27
      %p120 = scmp.lt.s32.totalorder %s27, 8
      %p121 = pnand %p119, %p120
      %p122 = pneg %p121
      // Predicated region
      $region9: #{tpu_custom_call.1} parent=5 // pred_check
        _
      $region10: #{tpu_custom_call.1} parent=5 // pred_check_branch
        %124 = sbr.rel (%p121) target = $region12
      $region11: #{tpu_custom_call.1} parent=5 // pred_region
        %s125 = ssub.s32 %s27, 1
        // Predicated region
        $region13: #{tpu_custom_call.1} parent=11 // pred_check
          %p126 = pneg %p48
        $region14: #{tpu_custom_call.1} parent=11 // pred_check_branch
          %128 = sbr.rel (%p126) target = $region16
        $region15: #{tpu_custom_call.1} parent=11 // pred_region
          _
        $region16: #{tpu_custom_call.1} parent=11 // pred_fallthru
          _
        // Predicated region
        $region17: #{tpu_custom_call.1} parent=11 // pred_check
          %p129 = pneg %p69
        $region18: #{tpu_custom_call.1} parent=11 // pred_check_branch
          %131 = sbr.rel (%p129) target = $region20
        $region19: #{tpu_custom_call.1} parent=11 // pred_region
          _
        $region20: #{tpu_custom_call.1} parent=11 // pred_fallthru
          _
        // Predicated region
        $region21: #{tpu_custom_call.1} parent=11 // pred_check
          %p132 = pneg %p90
        $region22: #{tpu_custom_call.1} parent=11 // pred_check_branch
          %134 = sbr.rel (%p132) target = $region24
        $region23: #{tpu_custom_call.1} parent=11 // pred_region
          _
        $region24: #{tpu_custom_call.1} parent=11 // pred_fallthru
          _
      $region12: #{tpu_custom_call.1} parent=5 // pred_fallthru
        _
      %p135 = scmp.lt.s32.totalorder %s27, 7
      // Predicated region
      $region25: #{tpu_custom_call.1} parent=5 // pred_check
        %p136 = pneg %p135
      $region26: #{tpu_custom_call.1} parent=5 // pred_check_branch
        %138 = sbr.rel (%p136) target = $region28
      $region27: #{tpu_custom_call.1} parent=5 // pred_region
        _
      $region28: #{tpu_custom_call.1} parent=5 // pred_fallthru
        _
      %p139 = scmp.le.s32.totalorder 1, %s27
      %p140 = scmp.lt.s32.totalorder %s27, 8
      %p141 = pnand %p139, %p140
      %p142 = pneg %p141
      // Predicated region
      $region29: #{tpu_custom_call.1} parent=5 // pred_check
        _
      $region30: #{tpu_custom_call.1} parent=5 // pred_check_branch
        %144 = sbr.rel (%p141) target = $region32
      $region31: #{tpu_custom_call.1} parent=5 // pred_region
        %s145 = ssub.s32 %s27, 1
        %p146 = pneg %p48
        %p147 = pneg %p45
        %p148 = pneg %p69
        %p149 = pneg %p66
        %p150 = pneg %p90
        %p151 = pneg %p87
        %p152 = pneg %p111
        %p153 = pneg %p108
        %p154 = scmp.eq.s32.totalorder %s32, 0
        // Predicated region
        $region33: #{tpu_custom_call.1} parent=31 // pred_check
          %p155 = pneg %p154
        $region34: #{tpu_custom_call.1} parent=31 // pred_check_branch
          %157 = sbr.rel (%p155) target = $region36
        $region35: #{tpu_custom_call.1} parent=31 // pred_region
          %v158 = vld [vmem:[%s3] sm:$0xff]
          %v159 = vld [vmem:[%s3 + $0x8] sm:$0xff]
          %v160 = vld [vmem:[%s3 + $0x10] sm:$0xff]
          %v161 = vld [vmem:[%s3 + $0x18] sm:$0xff]
          %v162 = vld [vmem:[%s3 + $0x20] sm:$0xff]
          %v163 = vld [vmem:[%s3 + $0x28] sm:$0xff]
          %v164 = vld [vmem:[%s3 + $0x30] sm:$0xff]
          %v165 = vld [vmem:[%s3 + $0x38] sm:$0xff]
          %v166 = vld [vmem:[%s4] sm:$0xff]
          %v167 = vld [vmem:[%s4 + $0x8] sm:$0xff]
          %v168 = vld [vmem:[%s4 + $0x10] sm:$0xff]
          %v169 = vld [vmem:[%s4 + $0x18] sm:$0xff]
          %v170 = vld [vmem:[%s5] sm:$0x1]
          %v172 = vlaneseq
          %v173 = vshrl.u32 %v172, 7
          %v174 = vsub.s32 0, %v173
          %v175 = vrot.slane %v170, %v174
          %vm177 = vcmask 261120
          %v179 = vsel %vm177, %v158, 0
          %v182 = vsel %vm177, %v159, 0
          %v185 = vsel %vm177, %v160, 0
          %v188 = vsel %vm177, %v161, 0
          %v191 = vsel %vm177, %v162, 0
          %v194 = vsel %vm177, %v163, 0
          %v197 = vsel %vm177, %v164, 0
          %v200 = vsel %vm177, %v165, 0
          %202 = vmatprep.subr.mxu0 0.0
          %203 = vmatpush1.msra.mxu0 %v166
          %204 = vmatprep.subr.mxu0 0.0
          %205 = vmatpush1.msra.mxu0 %v167
          %206 = vmatprep.subr.mxu0 0.0
          %207 = vmatpush1.msra.mxu0 %v168
          %208 = vmatprep.subr.mxu0 0.0
          %209 = vmatpush1.msra.mxu0 %v169
          %210 = vmatprep.subr.mxu0 0.0
          %211 = vmatpush1.msra.mxu0 0.0
          %212 = vmatprep.subr.mxu0 0.0
          %213 = vmatpush1.msra.mxu0 0.0
          %214 = vmatprep.subr.mxu0 0.0
          %215 = vmatpush1.msra.mxu0 0.0
          %216 = vmatprep.subr.mxu0 0.0
          %217 = vmatpush1.msra.mxu0 0.0
          %218 = vmatprep.subr.mxu0 0.0
          %219 = vmatpush1.msra.mxu0 0.0
          %220 = vmatprep.subr.mxu0 0.0
          %221 = vmatpush1.msra.mxu0 0.0
          %222 = vmatprep.subr.mxu0 0.0
          %223 = vmatpush1.msra.mxu0 0.0
          %224 = vmatprep.subr.mxu0 0.0
          %225 = vmatpush1.msra.mxu0 0.0
          %226 = vmatprep.subr.mxu0 0.0
          %227 = vmatpush1.msra.mxu0 0.0
          %228 = vmatprep.subr.mxu0 0.0
          %229 = vmatpush1.msra.mxu0 0.0
          %230 = vmatprep.subr.mxu0 0.0
          %231 = vmatpush1.msra.mxu0 0.0
          %232 = vmatprep.subr.mxu0 0.0
          %233 = vmatpush1.msra.mxu0 0.0
          %234 = vmatprep.subr.mxu0 0.0
          %235 = vmatpush1.msra.mxu0 0.0
          %236 = vmatprep.subr.mxu0 0.0
          %237 = vmatpush1.msra.mxu0 0.0
          %238 = vmatprep.subr.mxu0 0.0
          %239 = vmatpush1.msra.mxu0 0.0
          %240 = vmatprep.subr.mxu0 0.0
          %241 = vmatpush1.msra.mxu0 0.0
          %242 = vmatprep.subr.mxu0 0.0
          %243 = vmatpush1.msra.mxu0 0.0
          %244 = vmatprep.subr.mxu0 0.0
          %245 = vmatpush1.msra.mxu0 0.0
          %246 = vmatprep.subr.mxu0 0.0
          %247 = vmatpush1.msra.mxu0 0.0
          %248 = vmatprep.subr.mxu0 0.0
          %249 = vmatpush1.msra.mxu0 0.0
          %250 = vmatprep.subr.mxu0 0.0
          %251 = vmatpush1.msra.mxu0 0.0
          %252 = vmatprep.subr.mxu0 0.0
          %253 = vmatpush1.msra.mxu0 0.0
          %254 = vmatprep.subr.mxu0 0.0
          %255 = vmatpush1.msra.mxu0 0.0
          %256 = vmatprep.subr.mxu0 0.0
          %257 = vmatpush1.msra.mxu0 0.0
          %258 = vmatprep.subr.mxu0 0.0
          %259 = vmatpush1.msra.mxu0 0.0
          %260 = vmatprep.subr.mxu0 0.0
          %261 = vmatpush1.msra.mxu0 0.0
          %262 = vmatprep.subr.mxu0 0.0
          %263 = vmatpush1.msra.mxu0 0.0
          %264 = vmatprep.subr.mxu0 0.0
          %265 = vmatpush1.msra.mxu0 0.0
          %266 = vmatprep.mubr.f32.mxu0 0.0
          %267 = vmatmul.mubr.f32.gmra.mrb[0].mxu0 %v179
          %v268 = vpop.f32.mrb[0].mxu0
          %v269 = vadd.f32 %v175, %v268
          %v270 = vpop.f32.mrb[0].mxu0
          %271 = vmatprep.mubr.f32.mxu0 0.0
          %272 = vmatmul.mubr.f32.gmra.mrb[0].mxu0 %v182
          %v273 = vpop.f32.mrb[0].mxu0
          %v274 = vadd.f32 %v175, %v273
          %v275 = vpop.f32.mrb[0].mxu0
          %276 = vmatprep.mubr.f32.mxu0 0.0
          %277 = vmatmul.mubr.f32.gmra.mrb[0].mxu0 %v185
          %v278 = vpop.f32.mrb[0].mxu0
          %v279 = vadd.f32 %v175, %v278
          %v280 = vpop.f32.mrb[0].mxu0
          %281 = vmatprep.mubr.f32.mxu0 0.0
          %282 = vmatmul.mubr.f32.gmra.mrb[0].mxu0 %v188
          %v283 = vpop.f32.mrb[0].mxu0
          %v284 = vadd.f32 %v175, %v283
          %v285 = vpop.f32.mrb[0].mxu0
          %286 = vmatprep.mubr.f32.mxu0 0.0
          %287 = vmatmul.mubr.f32.gmra.mrb[0].mxu0 %v191
          %v288 = vpop.f32.mrb[0].mxu0
          %v289 = vadd.f32 %v175, %v288
          %v290 = vpop.f32.mrb[0].mxu0
          %291 = vmatprep.mubr.f32.mxu0 0.0
          %292 = vmatmul.mubr.f32.gmra.mrb[0].mxu0 %v194
          %v293 = vpop.f32.mrb[0].mxu0
          %v294 = vadd.f32 %v175, %v293
          %v295 = vpop.f32.mrb[0].mxu0
          %296 = vmatprep.mubr.f32.mxu0 0.0
          %297 = vmatmul.mubr.f32.gmra.mrb[0].mxu0 %v197
          %v298 = vpop.f32.mrb[0].mxu0
          %v299 = vadd.f32 %v175, %v298
          %v300 = vpop.f32.mrb[0].mxu0
          %301 = vmatprep.mubr.f32.mxu0 0.0
          %302 = vmatmul.mubr.f32.gmra.mrb[0].mxu0 %v200
          %v303 = vpop.f32.mrb[0].mxu0
          %v304 = vadd.f32 %v175, %v303
          %v305 = vpop.f32.mrb[0].mxu0
          %306 = vdwg.mxu0
          %307 = vst.msk [vmem:[#allocation2] sm:$0xff] %vm177, %v269
          %308 = vst.msk [vmem:[#allocation2 + $0x8] sm:$0xff] %vm177, %v274
          %309 = vst.msk [vmem:[#allocation2 + $0x10] sm:$0xff] %vm177, %v279
          %310 = vst.msk [vmem:[#allocation2 + $0x18] sm:$0xff] %vm177, %v284
          %311 = vst.msk [vmem:[#allocation2 + $0x20] sm:$0xff] %vm177, %v289
          %312 = vst.msk [vmem:[#allocation2 + $0x28] sm:$0xff] %vm177, %v294
          %313 = vst.msk [vmem:[#allocation2 + $0x30] sm:$0xff] %vm177, %v299
          %314 = vst.msk [vmem:[#allocation2 + $0x38] sm:$0xff] %vm177, %v304
          %vm315 = vcmask 257024
          %316 = vst.msk [vmem:[#allocation4] sm:$0xf] %vm315, 0.0
          %317 = vst.msk [vmem:[#allocation4 + $0x4] sm:$0xf] %vm315, 0.0
          %318 = vst.msk [vmem:[#allocation4 + $0x8] sm:$0xf] %vm315, 0.0
          %319 = vst.msk [vmem:[#allocation4 + $0xc] sm:$0xf] %vm315, 0.0
          %320 = vst.msk [vmem:[#allocation4 + $0x10] sm:$0xf] %vm315, 0.0
          %321 = vst.msk [vmem:[#allocation5] sm:$0xf] %vm315, -inf
        $region36: #{tpu_custom_call.1} parent=31 // pred_fallthru
          _
        %s322 = sld [smem:[#allocation7 + %s32]]
        %s323 = sadd.s32 %s322, 1
        %s324 = smul.u32 %s323, 4
        %s325 = scalar_lea.vmem [#allocation4], %s324
        %v326 = vld [vmem:[%s325] sm:$0xf]
        %vm327 = vcmask 257024
        %328 = vst.msk [vmem:[#allocation3] sm:$0xf] %vm327, %v326
        %s329 = smul.u32 %s32, 128
        %s330 = sld [smem:[#allocation8 + %s329]]
        %s331 = sld [smem:[#allocation9 + %s329]]
        %s332 = scvt.s32.f32 %s331
        %v333 = vld [vmem:[#allocation3] sm:$0x1]
        %s334 = scalar_lea.vmem [#allocation2], %s330
        %v335 = vld [vmem:[%s334] sm:$0x1]
        %v336 = vstv %s332
        %v337 = vmul.f32 %v335, %v336
        %v338 = vadd.f32 %v333, %v337
        %vm339 = vcmask 253952
        %340 = vst.msk [vmem:[#allocation3] sm:$0x1] %vm339, %v338
        %s341 = sadd.s32 %s329, 1
        %s342 = sld [smem:[#allocation8 + %s341]]
        %s343 = sld [smem:[#allocation9 + %s341]]
        %s344 = scvt.s32.f32 %s343
        %v345 = vld [vmem:[#allocation3 + $0x1] sm:$0x1]
        %s346 = scalar_lea.vmem [#allocation2], %s342
        %v347 = vld [vmem:[%s346] sm:$0x1]
        %v348 = vstv %s344
        %v349 = vmul.f32 %v347, %v348
        %v350 = vadd.f32 %v345, %v349
        %351 = vst.msk [vmem:[#allocation3 + $0x1] sm:$0x1] %vm339, %v350
        %s352 = sadd.s32 %s329, 2
        %s353 = sld [smem:[#allocation8 + %s352]]
        %s354 = sld [smem:[#allocation9 + %s352]]
        %s355 = scvt.s32.f32 %s354
        %v356 = vld [vmem:[#allocation3 + $0x2] sm:$0x1]
        %s357 = scalar_lea.vmem [#allocation2], %s353
        %v358 = vld [vmem:[%s357] sm:$0x1]
        %v359 = vstv %s355
        %v360 = vmul.f32 %v358, %v359
        %v361 = vadd.f32 %v356, %v360
        %362 = vst.msk [vmem:[#allocation3 + $0x2] sm:$0x1] %vm339, %v361
        %s363 = sadd.s32 %s329, 3
        %s364 = sld [smem:[#allocation8 + %s363]]
        %s365 = sld [smem:[#allocation9 + %s363]]
        %s366 = scvt.s32.f32 %s365
        %v367 = vld [vmem:[#allocation3 + $0x3] sm:$0x1]
        %s368 = scalar_lea.vmem [#allocation2], %s364
        %v369 = vld [vmem:[%s368] sm:$0x1]
        %v370 = vstv %s366
        %v371 = vmul.f32 %v369, %v370
        %v372 = vadd.f32 %v367, %v371
        %373 = vst.msk [vmem:[#allocation3 + $0x3] sm:$0x1] %vm339, %v372
        %v374 = vld [vmem:[#allocation3] sm:$0xf]
        %375 = vst.msk [vmem:[%s325] sm:$0xf] %vm327, 0.0
        %s376 = smul.u32 %s322, 4
        %s377 = scalar_lea.vmem [#allocation4], %s376
        %v378 = vld [vmem:[%s377] sm:$0xf]
        %v379 = vadd.f32 %v378, %v374
        %380 = vst.msk [vmem:[%s377] sm:$0xf] %vm327, %v379
        %v381 = vld [vmem:[#allocation5] sm:$0xf]
        %v382 = vmax.f32 %v381, %v374
        %383 = vst.msk [vmem:[#allocation5] sm:$0xf] %vm327, %v382
        %p384 = scmp.eq.s32.totalorder %s32, 6
        // Predicated region
        $region37: #{tpu_custom_call.1} parent=31 // pred_check
          %p385 = pneg %p384
        $region38: #{tpu_custom_call.1} parent=31 // pred_check_branch
          %387 = sbr.rel (%p385) target = $region40
        $region39: #{tpu_custom_call.1} parent=31 // pred_region
          %v388 = vld [vmem:[#allocation5] sm:$0xf]
          %389 = vst.msk [vmem:[#allocation10] sm:$0xf] %vm327, %v388
        $region40: #{tpu_custom_call.1} parent=31 // pred_fallthru
          _
        // Predicated region
        $region41: #{tpu_custom_call.1} parent=31 // pred_check
          %p390 = pneg %p108
        $region42: #{tpu_custom_call.1} parent=31 // pred_check_branch
          %392 = sbr.rel (%p390) target = $region44
        $region43: #{tpu_custom_call.1} parent=31 // pred_region
          %s394 = ssub.s32 64, 64
          %395 = vsyncadd [#allocation11], %s394
          %s397 = sshll.u32 [#allocation10], 4
          %s398 = int_to_ptr.vmem [resolvable:$true] %s397
          %400 = dma.vmem_to_hbm [thread:$0]  %s398, 64, %s6, [#allocation11]
        $region44: #{tpu_custom_call.1} parent=31 // pred_fallthru
          _
        // Predicated region
        $region45: #{tpu_custom_call.1} parent=31 // pred_check
          %p401 = pneg %p108
        $region46: #{tpu_custom_call.1} parent=31 // pred_check_branch
          %403 = sbr.rel (%p401) target = $region48
        $region47: #{tpu_custom_call.1} parent=31 // pred_region
          %404 = dma.done [#allocation11], 64
        $region48: #{tpu_custom_call.1} parent=31 // pred_fallthru
          _
      $region32: #{tpu_custom_call.1} parent=5 // pred_fallthru
        _
      %p405 = scmp.le.s32.totalorder 2, %s27
      // Predicated region
      $region49: #{tpu_custom_call.1} parent=5 // pred_check
        %p406 = pneg %p405
      $region50: #{tpu_custom_call.1} parent=5 // pred_check_branch
        %408 = sbr.rel (%p406) target = $region52
      $region51: #{tpu_custom_call.1} parent=5 // pred_region
        %s409 = ssub.s32 %s27, 2
      $region52: #{tpu_custom_call.1} parent=5 // pred_fallthru
        _
    $region6: #{tpu_custom_call.1} parent=1 // loop_footer
      %s31 = sadd.s32 1, %s27
    $region7: #{tpu_custom_call.1} parent=1 // loop_footer_branch
      %26 = sbr.rel target = $region3
    $region8: #{tpu_custom_call.1} parent=1 // loop_exit
      _
    %410 = vsyncpa [#allocation11], 1
    %s411 = scalar_lea.sflag [#allocation11], 1
    %412 = vsyncpa %s411, 1

</llo_original>
